<compile_context>
chip_gen: v7x
topology: tpu7x:2x2x1
jax: 0.10.0
libtpu: 0.0.40
codegen_flags: <defaults>
</compile_context>

<pallas_src>
import jax
import jax.numpy as jnp
from jax.experimental import pallas as pl
from jax.experimental.pallas import tpu as pltpu

_LANE = 128
_TINY_B = 512   # below this: single no-grid invocation (no pipeline overhead)
_MAX_TB = 2048  # batch tile cap for the grid path (VMEM-safe on all gens)


def _round_up(x, m):
    return -(-x // m) * m


def iris_mlp_kernel(x_ref, w1_ref, b1_ref, w2_ref, b2_ref, o_ref):
    x = x_ref[...]                       # [TB, in]
    w1 = w1_ref[...]                     # [in, hidden]
    in_sz = w1.shape[0]                  # static at trace time -> loop unrolls

    # fc1 on the VPU: K is tiny (4), so an unrolled broadcast multiply-add
    # chain beats pushing a >99%-padding matmul through the MXU. Column
    # extracts hoisted so Mosaic can schedule the broadcasts together.
    cols = [x[:, k:k + 1] for k in range(in_sz)]        # each [TB, 1]
    h = cols[0] * w1[0:1, :] + b1_ref[...]              # [TB, hidden]
    for k in range(1, in_sz):
        h = h + cols[k] * w1[k:k + 1, :]

    # ReLU
    h = jnp.maximum(h, 0.0)

    # fc2 on the MXU: [TB, hidden] @ [hidden, num_classes].
    out = jnp.dot(h, w2_ref[...], preferred_element_type=jnp.float32)
    o_ref[...] = (out + b2_ref[...]).astype(o_ref.dtype)


def pack_params(w1, b1, w2, b2):
    """One-time packing of PyTorch-layout params (W: [out, in], b: [out]) into
    the kernel layout: pre-transposed weights [in, out] and [1, out] biases."""
    w1_t = jnp.asarray(w1).T                      # [input_size, hidden]
    w2_t = jnp.asarray(w2).T                      # [hidden, num_classes]
    b1_2d = jnp.asarray(b1).reshape(1, -1)        # [1, hidden]
    b2_2d = jnp.asarray(b2).reshape(1, -1)        # [1, num_classes]
    return w1_t, b1_2d, w2_t, b2_2d


def iris_net_forward(x, w1_t, b1_2d, w2_t, b2_2d):
    """x: [B, input_size]; w1_t: [input_size, hidden]; b1_2d: [1, hidden];
       w2_t: [hidden, num_classes]; b2_2d: [1, num_classes]. Returns [B, num_classes]."""
    B, in_sz = x.shape
    assert w1_t.shape[0] == in_sz, (w1_t.shape, in_sz)
    hidden = w1_t.shape[1]
    assert b1_2d.shape == (1, hidden), b1_2d.shape
    assert w2_t.shape[0] == hidden, w2_t.shape
    num_classes = w2_t.shape[1]
    assert b2_2d.shape == (1, num_classes), b2_2d.shape

    if B <= _TINY_B:
        # Tiny / moderate batch: single invocation, no grid -> no software
        # pipeline prologue/epilogue, no per-step DMA bookkeeping. Exact
        # output shape, so nothing to slice afterwards.
        return pl.pallas_call(
            iris_mlp_kernel,
            out_shape=jax.ShapeDtypeStruct((B, num_classes), jnp.float32),
        )(x, w1_t, b1_2d, w2_t, b2_2d)

    # Large batch: tile only the batch axis over the UNPADDED extent; Pallas
    # clips the ragged boundary block (rows are independent). Weights/biases
    # map to block (0, 0) every step, so they stay VMEM-resident. Keep >= 2
    # grid steps so v7x can shard the "parallel" axis across its 2 TCs.
    tb = min(_MAX_TB, _round_up(-(-B // 2), _LANE))
    grid = (pl.cdiv(B, tb),)
    return pl.pallas_call(
        iris_mlp_kernel,
        out_shape=jax.ShapeDtypeStruct((B, num_classes), jnp.float32),
        grid=grid,
        in_specs=[
            pl.BlockSpec((tb, in_sz), lambda i: (i, 0)),
            pl.BlockSpec((in_sz, hidden), lambda i: (0, 0)),
            pl.BlockSpec((1, hidden), lambda i: (0, 0)),
            pl.BlockSpec((hidden, num_classes), lambda i: (0, 0)),
            pl.BlockSpec((1, num_classes), lambda i: (0, 0)),
        ],
        out_specs=pl.BlockSpec((tb, num_classes), lambda i: (i, 0)),
        compiler_params=pltpu.CompilerParams(
            dimension_semantics=("parallel",),
        ),
    )(x, w1_t, b1_2d, w2_t, b2_2d)


def reference_forward(x, w1_t, b1_2d, w2_t, b2_2d):
    h = jnp.maximum(x @ w1_t + b1_2d, 0.0)
    return h @ w2_t + b2_2d


if __name__ == "__main__":
    input_size, hidden_size, num_classes = 4, 16, 3
    batch = 8

    key = jax.random.PRNGKey(0)
    kx, kw1, kb1, kw2, kb2, kxb, kxr = jax.random.split(key, 7)

    # Deterministic synthetic parameters in PyTorch layout (W: [out, in]).
    x = jax.random.normal(kx, (batch, input_size), dtype=jnp.float32)
    w1 = jax.random.normal(kw1, (hidden_size, input_size), jnp.float32) * 0.5
    b1 = jax.random.normal(kb1, (hidden_size,), jnp.float32) * 0.1
    w2 = jax.random.normal(kw2, (num_classes, hidden_size), jnp.float32) * 0.5
    b2 = jax.random.normal(kb2, (num_classes,), jnp.float32) * 0.1

    # One-time parameter packing (hoisted out of the per-call forward).
    w1_t, b1_2d, w2_t, b2_2d = pack_params(w1, b1, w2, b2)

    # Tiny-batch (no-grid) path.
    out = jax.block_until_ready(iris_net_forward(x, w1_t, b1_2d, w2_t, b2_2d))
    ref = reference_forward(x, w1_t, b1_2d, w2_t, b2_2d)
    assert out.shape == (batch, num_classes), out.shape
    assert jnp.allclose(out, ref, atol=1e-5, rtol=1e-5), (out, ref)

    # Batched (grid over batch, resident weights, >=2 steps) path.
    big_batch = 1024
    xb = jax.random.normal(kxb, (big_batch, input_size), dtype=jnp.float32)
    outb = jax.block_until_ready(iris_net_forward(xb, w1_t, b1_2d, w2_t, b2_2d))
    refb = reference_forward(xb, w1_t, b1_2d, w2_t, b2_2d)
    assert outb.shape == (big_batch, num_classes), outb.shape
    assert jnp.allclose(outb, refb, atol=1e-4, rtol=1e-4)

    # Ragged batch (not a multiple of the tile): exercises boundary-block clipping.
    ragged_batch = 1000
    xr = jax.random.normal(kxr, (ragged_batch, input_size), dtype=jnp.float32)
    outr = jax.block_until_ready(iris_net_forward(xr, w1_t, b1_2d, w2_t, b2_2d))
    refr = reference_forward(xr, w1_t, b1_2d, w2_t, b2_2d)
    assert outr.shape == (ragged_batch, num_classes), outr.shape
    assert jnp.allclose(outr, refr, atol=1e-4, rtol=1e-4)

    print("KERNEL_OK")
</pallas_src>

<mosaic_0001>
module attributes {stable_mosaic.version = 11 : i64} {
  func.func @iris_mlp_kernel(%arg0: memref<8x4xf32, #tpu.memory_space<vmem>>, %arg1: memref<4x16xf32, #tpu.memory_space<vmem>>, %arg2: memref<1x16xf32, #tpu.memory_space<vmem>>, %arg3: memref<16x3xf32, #tpu.memory_space<vmem>>, %arg4: memref<1x3xf32, #tpu.memory_space<vmem>>, %arg5: memref<8x3xf32, #tpu.memory_space<vmem>>) attributes {dimension_semantics = [], scalar_prefetch = 0 : i64, scratch_operands = 0 : i64, tpu.core_type = #tpu.core_type<tc>} {
    %c0 = arith.constant 0 : index
    %c0_0 = arith.constant 0 : index
    %0 = vector.load %arg0[%c0, %c0_0] : memref<8x4xf32, #tpu.memory_space<vmem>>, vector<8x4xf32>
    %c0_1 = arith.constant 0 : index
    %c0_2 = arith.constant 0 : index
    %1 = vector.load %arg1[%c0_1, %c0_2] : memref<4x16xf32, #tpu.memory_space<vmem>>, vector<4x16xf32>
    %2 = vector.extract_strided_slice %0 {offsets = [0, 0], sizes = [8, 1], strides = [1, 1]} : vector<8x4xf32> to vector<8x1xf32>
    %3 = vector.extract_strided_slice %0 {offsets = [0, 1], sizes = [8, 1], strides = [1, 1]} : vector<8x4xf32> to vector<8x1xf32>
    %4 = vector.extract_strided_slice %0 {offsets = [0, 2], sizes = [8, 1], strides = [1, 1]} : vector<8x4xf32> to vector<8x1xf32>
    %5 = vector.extract_strided_slice %0 {offsets = [0, 3], sizes = [8, 1], strides = [1, 1]} : vector<8x4xf32> to vector<8x1xf32>
    %6 = vector.extract_strided_slice %1 {offsets = [0, 0], sizes = [1, 16], strides = [1, 1]} : vector<4x16xf32> to vector<1x16xf32>
    %7 = vector.broadcast %2 : vector<8x1xf32> to vector<8x16xf32>
    %8 = vector.broadcast %6 : vector<1x16xf32> to vector<8x16xf32>
    %9 = arith.mulf %7, %8 : vector<8x16xf32>
    %c0_3 = arith.constant 0 : index
    %c0_4 = arith.constant 0 : index
    %10 = vector.load %arg2[%c0_3, %c0_4] : memref<1x16xf32, #tpu.memory_space<vmem>>, vector<1x16xf32>
    %11 = vector.broadcast %10 : vector<1x16xf32> to vector<8x16xf32>
    %12 = arith.addf %9, %11 : vector<8x16xf32>
    %13 = vector.extract_strided_slice %1 {offsets = [1, 0], sizes = [1, 16], strides = [1, 1]} : vector<4x16xf32> to vector<1x16xf32>
    %14 = vector.broadcast %3 : vector<8x1xf32> to vector<8x16xf32>
    %15 = vector.broadcast %13 : vector<1x16xf32> to vector<8x16xf32>
    %16 = arith.mulf %14, %15 : vector<8x16xf32>
    %17 = arith.addf %12, %16 : vector<8x16xf32>
    %18 = vector.extract_strided_slice %1 {offsets = [2, 0], sizes = [1, 16], strides = [1, 1]} : vector<4x16xf32> to vector<1x16xf32>
    %19 = vector.broadcast %4 : vector<8x1xf32> to vector<8x16xf32>
    %20 = vector.broadcast %18 : vector<1x16xf32> to vector<8x16xf32>
    %21 = arith.mulf %19, %20 : vector<8x16xf32>
    %22 = arith.addf %17, %21 : vector<8x16xf32>
    %23 = vector.extract_strided_slice %1 {offsets = [3, 0], sizes = [1, 16], strides = [1, 1]} : vector<4x16xf32> to vector<1x16xf32>
    %24 = vector.broadcast %5 : vector<8x1xf32> to vector<8x16xf32>
    %25 = vector.broadcast %23 : vector<1x16xf32> to vector<8x16xf32>
    %26 = arith.mulf %24, %25 : vector<8x16xf32>
    %27 = arith.addf %22, %26 : vector<8x16xf32>
    %cst = arith.constant 0.000000e+00 : f32
    %28 = vector.broadcast %cst : f32 to vector<8x16xf32>
    %29 = arith.maximumf %27, %28 : vector<8x16xf32>
    %c0_5 = arith.constant 0 : index
    %c0_6 = arith.constant 0 : index
    %30 = vector.load %arg3[%c0_5, %c0_6] : memref<16x3xf32, #tpu.memory_space<vmem>>, vector<16x3xf32>
    %cst_7 = arith.constant dense<0.000000e+00> : vector<8x3xf32>
    %31 = tpu.matmul %29, %30, %cst_7 {dimension_numbers = #tpu.dot_dimension_numbers<[1], [0], [0], [1], [0, 0, 1, 1], [], []>} : vector<8x16xf32>, vector<16x3xf32>, vector<8x3xf32> -> vector<8x3xf32>
    %c0_8 = arith.constant 0 : index
    %c0_9 = arith.constant 0 : index
    %32 = vector.load %arg4[%c0_8, %c0_9] : memref<1x3xf32, #tpu.memory_space<vmem>>, vector<1x3xf32>
    %33 = vector.broadcast %32 : vector<1x3xf32> to vector<8x3xf32>
    %34 = arith.addf %31, %33 : vector<8x3xf32>
    %c0_10 = arith.constant 0 : index
    %c0_11 = arith.constant 0 : index
    %35 = vector.load %arg5[%c0_10, %c0_11] : memref<8x3xf32, #tpu.memory_space<vmem>>, vector<8x3xf32>
    tpu.vector_store %arg5[%c0_10, %c0_11], %34 {strides = array<i32>} : memref<8x3xf32, #tpu.memory_space<vmem>>, vector<8x3xf32>,
    return
  }
}

</mosaic_0001>

<llo_original>
// kernel: tpu_custom_call.1
$region0: #{tpu_custom_call.1}
  #allocation0 [shape = 'u32[]', space=smem, size = 0x4, offset = 0x4, fixed_abs, tag = 'smem constant byte address 0x4 - core index']
  #allocation1 [shape = 'u32[144,128]{1,0:T(1,128)}', space=vmem, size = 0x12000, scoped, tag = 'internal scratch']
  %s0 = inlined_call_operand.vmem [shape: f32[8,4], index: 0, kind: input, shape index: {}]
  %s1 = inlined_call_operand.vmem [shape: f32[4,16], index: 1, kind: input, shape index: {}]
  %s2 = inlined_call_operand.vmem [shape: f32[1,16], index: 2, kind: input, shape index: {}]
  %s3 = inlined_call_operand.vmem [shape: f32[16,3], index: 3, kind: input, shape index: {}]
  %s4 = inlined_call_operand.vmem [shape: f32[1,3], index: 4, kind: input, shape index: {}]
  %s5 = inlined_call_operand.vmem [shape: f32[8,3], index: 5, kind: output, shape index: {}]
  %s6 = sld [smem:[#allocation0]]
  $region30: #{tpu_custom_call.1} parent=0
    _
  %s8 = ssub.s32 1, %s6
  %s9 = scalar_select 0, %s8, %s6
  // Predicated region
  $region2: #{tpu_custom_call.1} parent=0 // pred_check
    _
  $region3: #{tpu_custom_call.1} parent=0 // pred_check_branch
    %11 = sbr.rel (0) target = $region5
  $region4: #{tpu_custom_call.1} parent=0 // pred_region
    _
  $region5: #{tpu_custom_call.1} parent=0 // pred_fallthru
    _
  // Predicated region
  $region6: #{tpu_custom_call.1} parent=0 // pred_check
    _
  $region7: #{tpu_custom_call.1} parent=0 // pred_check_branch
    %13 = sbr.rel (0) target = $region9
  $region8: #{tpu_custom_call.1} parent=0 // pred_region
    _
  $region9: #{tpu_custom_call.1} parent=0 // pred_fallthru
    _
  // Predicated region
  $region10: #{tpu_custom_call.1} parent=0 // pred_check
    _
  $region11: #{tpu_custom_call.1} parent=0 // pred_check_branch
    %15 = sbr.rel (0) target = $region13
  $region12: #{tpu_custom_call.1} parent=0 // pred_region
    _
  $region13: #{tpu_custom_call.1} parent=0 // pred_fallthru
    _
  // Predicated region
  $region14: #{tpu_custom_call.1} parent=0 // pred_check
    _
  $region15: #{tpu_custom_call.1} parent=0 // pred_check_branch
    %17 = sbr.rel (0) target = $region17
  $region16: #{tpu_custom_call.1} parent=0 // pred_region
    _
  $region17: #{tpu_custom_call.1} parent=0 // pred_fallthru
    _
  // Predicated region
  $region18: #{tpu_custom_call.1} parent=0 // pred_check
    _
  $region19: #{tpu_custom_call.1} parent=0 // pred_check_branch
    %19 = sbr.rel (0) target = $region21
  $region20: #{tpu_custom_call.1} parent=0 // pred_region
    _
  $region21: #{tpu_custom_call.1} parent=0 // pred_fallthru
    _
  %v20 = vld [vmem:[%s0] sm:$0xff]
  %v21 = vld [vmem:[%s1] sm:$0xf]
  %23 = vset.pattern.permute.xlu0 0
  %24 = vperm.xlu0 %23, %v20
  %v25 = vpop.permute.xlu0 %24
  %v27 = vlaneseq
  %v28 = vshrl.u32 %v27, 7
  %v29 = vsub.s32 0, %v28
  %v30 = vrot.slane %v21, %v29
  %v31 = vmul.f32 %v25, %v30
  %v32 = vld [vmem:[%s2] sm:$0x1]
  %v34 = vlaneseq
  %v35 = vshrl.u32 %v34, 7
  %v36 = vsub.s32 0, %v35
  %v37 = vrot.slane %v32, %v36
  %v39 = vadd.f32 %v31, %v37
  %40 = vset.pattern.permute.xlu0 1
  %41 = vperm.xlu0 %40, %v20
  %v42 = vpop.permute.xlu0 %41
  %v44 = vlaneseq
  %v45 = vshrl.u32 %v44, 7
  %v46 = vsub.s32 1, %v45
  %v47 = vrot.slane %v21, %v46
  %v48 = vmul.f32 %v42, %v47
  %v49 = vadd.f32 %v39, %v48
  %50 = vset.pattern.permute.xlu0 2
  %51 = vperm.xlu0 %50, %v20
  %v52 = vpop.permute.xlu0 %51
  %v54 = vlaneseq
  %v55 = vshrl.u32 %v54, 7
  %v56 = vsub.s32 2, %v55
  %v57 = vrot.slane %v21, %v56
  %v58 = vmul.f32 %v52, %v57
  %v59 = vadd.f32 %v49, %v58
  %60 = vset.pattern.permute.xlu0 3
  %61 = vperm.xlu0 %60, %v20
  %v62 = vpop.permute.xlu0 %61
  %v64 = vlaneseq
  %v65 = vshrl.u32 %v64, 7
  %v66 = vsub.s32 3, %v65
  %v67 = vrot.slane %v21, %v66
  %v68 = vmul.f32 %v62, %v67
  %v69 = vadd.f32 %v59, %v68
  %v70 = vmax.f32 %v69, 0.0
  %v71 = vld [vmem:[%s3] sm:$0xff]
  %v72 = vld [vmem:[%s3 + $0x8] sm:$0xff]
  %v73 = vld [vmem:[%s4] sm:$0x1]
  %v75 = vlaneseq
  %v76 = vshrl.u32 %v75, 7
  %v77 = vsub.s32 0, %v76
  %v78 = vrot.slane %v73, %v77
  %vm80 = vcmask 130048
  %v82 = vsel %vm80, %v70, 0
  %84 = vmatprep.subr.mxu0 0.0
  %85 = vmatpush1.msra.mxu0 %v71
  %86 = vmatprep.subr.mxu0 0.0
  %87 = vmatpush1.msra.mxu0 %v72
  %88 = vmatprep.subr.mxu0 0.0
  %89 = vmatpush1.msra.mxu0 0.0
  %90 = vmatprep.subr.mxu0 0.0
  %91 = vmatpush1.msra.mxu0 0.0
  %92 = vmatprep.subr.mxu0 0.0
  %93 = vmatpush1.msra.mxu0 0.0
  %94 = vmatprep.subr.mxu0 0.0
  %95 = vmatpush1.msra.mxu0 0.0
  %96 = vmatprep.subr.mxu0 0.0
  %97 = vmatpush1.msra.mxu0 0.0
  %98 = vmatprep.subr.mxu0 0.0
  %99 = vmatpush1.msra.mxu0 0.0
  %100 = vmatprep.subr.mxu0 0.0
  %101 = vmatpush1.msra.mxu0 0.0
  %102 = vmatprep.subr.mxu0 0.0
  %103 = vmatpush1.msra.mxu0 0.0
  %104 = vmatprep.subr.mxu0 0.0
  %105 = vmatpush1.msra.mxu0 0.0
  %106 = vmatprep.subr.mxu0 0.0
  %107 = vmatpush1.msra.mxu0 0.0
  %108 = vmatprep.subr.mxu0 0.0
  %109 = vmatpush1.msra.mxu0 0.0
  %110 = vmatprep.subr.mxu0 0.0
  %111 = vmatpush1.msra.mxu0 0.0
  %112 = vmatprep.subr.mxu0 0.0
  %113 = vmatpush1.msra.mxu0 0.0
  %114 = vmatprep.subr.mxu0 0.0
  %115 = vmatpush1.msra.mxu0 0.0
  %116 = vmatprep.subr.mxu0 0.0
  %117 = vmatpush1.msra.mxu0 0.0
  %118 = vmatprep.subr.mxu0 0.0
  %119 = vmatpush1.msra.mxu0 0.0
  %120 = vmatprep.subr.mxu0 0.0
  %121 = vmatpush1.msra.mxu0 0.0
  %122 = vmatprep.subr.mxu0 0.0
  %123 = vmatpush1.msra.mxu0 0.0
  %124 = vmatprep.subr.mxu0 0.0
  %125 = vmatpush1.msra.mxu0 0.0
  %126 = vmatprep.subr.mxu0 0.0
  %127 = vmatpush1.msra.mxu0 0.0
  %128 = vmatprep.subr.mxu0 0.0
  %129 = vmatpush1.msra.mxu0 0.0
  %130 = vmatprep.subr.mxu0 0.0
  %131 = vmatpush1.msra.mxu0 0.0
  %132 = vmatprep.subr.mxu0 0.0
  %133 = vmatpush1.msra.mxu0 0.0
  %134 = vmatprep.subr.mxu0 0.0
  %135 = vmatpush1.msra.mxu0 0.0
  %136 = vmatprep.subr.mxu0 0.0
  %137 = vmatpush1.msra.mxu0 0.0
  %138 = vmatprep.subr.mxu0 0.0
  %139 = vmatpush1.msra.mxu0 0.0
  %140 = vmatprep.subr.mxu0 0.0
  %141 = vmatpush1.msra.mxu0 0.0
  %142 = vmatprep.subr.mxu0 0.0
  %143 = vmatpush1.msra.mxu0 0.0
  %144 = vmatprep.subr.mxu0 0.0
  %145 = vmatpush1.msra.mxu0 0.0
  %146 = vmatprep.subr.mxu0 0.0
  %147 = vmatpush1.msra.mxu0 0.0
  %148 = vmatprep.mubr.f32.mxu0 0.0
  %149 = vmatmul.mubr.f32.gmra.mrb[0].mxu0 %v82
  %v150 = vpop.f32.mrb[0].mxu0
  %v151 = vadd.f32 %v78, %v150
  %v152 = vpop.f32.mrb[0].mxu0
  %153 = vdwg.mxu0
  %vm154 = vcmask 23552
  %155 = vst.msk [vmem:[%s5] sm:$0xff] %vm154, %v151
  // Predicated region
  $region22: #{tpu_custom_call.1} parent=0 // pred_check
    _
  $region23: #{tpu_custom_call.1} parent=0 // pred_check_branch
    %157 = sbr.rel (0) target = $region25
  $region24: #{tpu_custom_call.1} parent=0 // pred_region
    _
  $region25: #{tpu_custom_call.1} parent=0 // pred_fallthru
    _
  // Predicated region
  $region26: #{tpu_custom_call.1} parent=0 // pred_check
    _
  $region27: #{tpu_custom_call.1} parent=0 // pred_check_branch
    %159 = sbr.rel (0) target = $region29
  $region28: #{tpu_custom_call.1} parent=0 // pred_region
    _
  $region29: #{tpu_custom_call.1} parent=0 // pred_fallthru
    _

</llo_original>
